<compile_context>
chip_gen: v5e
topology: v5e:2x2
jax: 0.10.0
libtpu: 0.0.40
codegen_flags: <defaults>
</compile_context>

<pallas_src>
import functools

import jax
import jax.numpy as jnp
import numpy as np
from jax.experimental import pallas as pl
from jax.experimental.pallas import tpu as pltpu


# ----------------------------- Pallas kernel --------------------------------

def _energy_predictor_kernel(x_ref,       # (N, E)   N = batch_tile * T rows
                             w1_ref,      # (3E, F)  fused conv1 weight
                             w2_ref,      # (3F, F)  fused conv2 weight
                             p_ref,       # (8, F)   packed per-channel params
                             linb_ref,    # (1, 1)   SMEM scalar linear bias
                             o_ref,       # (1, N)
                             *, seq_len):
    n = x_ref.shape[0]
    x = x_ref[...]                        # (N, E) f32
    p = p_ref[...]                        # (8, F) f32

    # Position of each row inside its sequence (blocks are whole sequences,
    # so r % seq_len is the in-sequence index for both grid==1 and grid>1).
    t_idx = jax.lax.broadcasted_iota(jnp.int32, (n, 1), 0) % seq_len
    is_first = t_idx == 0                 # t == 0     -> no t-1 neighbor
    is_last = t_idx == (seq_len - 1)      # t == T-1   -> no t+1 neighbor

    def conv_ln_relu(h, w_ref, bias, gamma, beta):
        # Conv1d(k=3, pad=1) as one fused MXU matmul on shifted copies of h.
        # pltpu.roll matches jnp.roll: roll(h, 1)[i] == h[i-1]; wraparound rows
        # are masked out by is_first / is_last.
        h_m1 = jnp.where(is_first, 0.0, pltpu.roll(h, shift=1, axis=0))
        h_p1 = jnp.where(is_last, 0.0, pltpu.roll(h, shift=n - 1, axis=0))
        hk = jnp.concatenate([h_m1, h, h_p1], axis=-1)          # (N, 3*Cin)
        # TODO(synk): on v7x (MRB accumulate) three per-tap accumulating
        # matmuls would remove the lane-concat XLU work; keep the single fused
        # matmul, which is the right choice for v5e/v6e (FIFO result path).
        y = jnp.dot(hk.astype(w_ref.dtype), w_ref[...],
                    preferred_element_type=jnp.float32) + bias  # (N, Cout) f32
        # LayerNorm (f32 stats) + ReLU.  var = E[y^2] - mu^2 (biased, matches
        # PyTorch) -> one fewer (N,F) VPU pass and independent reductions.
        mu = jnp.mean(y, axis=-1, keepdims=True)
        var = jnp.maximum(jnp.mean(y * y, axis=-1, keepdims=True) - mu * mu, 0.0)
        y = (y - mu) * jax.lax.rsqrt(var + 1e-5) * gamma + beta
        return jnp.maximum(y, 0.0)        # Dropout is identity in eval mode.

    h = conv_ln_relu(x, w1_ref, p[0], p[1], p[2])   # conv block 1
    h = conv_ln_relu(h, w2_ref, p[3], p[4], p[5])   # conv block 2

    # Linear(F -> 1) + ReLU as a lane reduction (output channel == 1).
    out = jnp.sum(h * p[6], axis=-1) + linb_ref[0, 0]           # (N,)
    o_ref[0] = jnp.maximum(out, 0.0)

    # TODO(synk): with E=F=32 only 32/128 lanes are used; lane-packing 4
    # sequences with a block-diagonal fused weight would recover VPU/XLU
    # throughput but is only worth it at production sizes.


# ------------------------------ wrapper --------------------------------------

def _choose_batch_tile(B, T, target_rows=2048):
    """Pick batch_tile so each grid step gets a 128-lane-aligned row slab close
    to target_rows (amortizes grid overhead, enables DMA/compute pipelining and
    v7x megacore split).  Falls back to the whole batch (single full-array
    step, always legal for small/unaligned shapes)."""
    candidates = [bt for bt in range(1, B) if B % bt == 0 and (bt * T) % 128 == 0]
    if not candidates:
        return B
    under = [bt for bt in candidates if bt * T <= target_rows]
    return max(under) if under else min(candidates)


def energy_predictor_forward(encoder_output, params, *,
                             compute_dtype=jnp.float32, batch_tile=None):
    """encoder_output: (B, T, E) float32.  Returns (1, B, T) (eval-mode path)."""
    B, T, E = encoder_output.shape
    K, _, F = params["conv1_w"].shape
    if batch_tile is None:
        batch_tile = _choose_batch_tile(B, T)
    assert B % batch_tile == 0, "batch_tile must divide B"
    grid = (B // batch_tile,)
    n = batch_tile * T        # rows per grid step
    if grid[0] > 1:
        # Lane-dense (1, n) output block + (n, E) input block tiling rules.
        assert n % 128 == 0, "multi-step tiling requires 128-aligned row slabs"

    # Flatten B*T into one row axis; channels stay on lanes.
    x = encoder_output.reshape(B * T, E)

    # Fuse the 3 conv taps into one contraction: (K, Cin, Cout) -> (K*Cin, Cout).
    w1 = params["conv1_w"].reshape(K * E, F).astype(compute_dtype)
    w2 = params["conv2_w"].reshape(K * F, F).astype(compute_dtype)

    # Pack all (1, F) params into one (8, F) tile: one DMA instead of ~8.
    packed = jnp.concatenate(
        [params["conv1_b"], params["ln1_g"], params["ln1_b"],
         params["conv2_b"], params["ln2_g"], params["ln2_b"],
         params["lin_w"], jnp.zeros((1, F), jnp.float32)], axis=0)

    # Explicit VMEM budget: double-buffered in/out blocks + resident weights
    # + matmul/LN temporaries, with 1.5x headroom; clamp to [32, 64] MiB so the
    # limit is valid on v5e/v6e (128 MiB phys) and v7x (64 MiB phys).
    dsz = jnp.dtype(compute_dtype).itemsize
    per_step = (2 * n * E * 4 + 2 * n * 4                      # x + out blocks
                + 2 * (K * E * F + K * F * F) * dsz + 2 * 8 * F * 4  # weights
                + n * (K * E + K * F) * dsz + 3 * n * F * 4)   # hk + (N,F) temps
    vmem_limit = int(min(64 << 20, max(32 << 20, int(1.5 * per_step))))

    # Advisory cost estimate for XLA's scheduler.
    flops = int(B * T * (2 * (K * E * F + K * F * F + F) + 12 * F))
    cost = pl.CostEstimate(
        flops=flops,
        transcendentals=int(2 * B * T),                        # 2 rsqrt per row
        bytes_accessed=int(x.size * 4 + B * T * 4
                           + (w1.size + w2.size) * dsz + packed.size * 4 + 4))

    full = lambda shape: pl.BlockSpec(shape, lambda g: (0, 0))

    out = pl.pallas_call(
        functools.partial(_energy_predictor_kernel, seq_len=T),
        out_shape=jax.ShapeDtypeStruct((1, B * T), jnp.float32),
        grid_spec=pltpu.PrefetchScalarGridSpec(
            num_scalar_prefetch=0,
            grid=grid,
            in_specs=[
                pl.BlockSpec((n, E), lambda g: (g, 0)),            # activations
                full((K * E, F)),                                  # fused conv1 W
                full((K * F, F)),                                  # fused conv2 W
                full((8, F)),                                      # packed params
                pl.BlockSpec(memory_space=pltpu.MemorySpace.SMEM), # lin_b scalar
            ],
            out_specs=pl.BlockSpec((1, n), lambda g: (0, g)),      # lane-dense
        ),
        compiler_params=pltpu.CompilerParams(
            dimension_semantics=("parallel",),
            vmem_limit_bytes=vmem_limit),
        cost_estimate=cost,
    )(x, w1, w2, packed, params["lin_b"])

    # PyTorch: out.squeeze() -> (B, T); eval mode: out.unsqueeze(0) -> (1, B, T).
    # TODO(synk): torch's .squeeze() would also drop the batch dim when B == 1;
    # we keep a fixed (1, B, T) shape (values identical).
    return out.reshape(B, T)[None]


# --------------------------- pure-JAX reference ------------------------------

def _reference_forward(x, p):
    def conv(h, w, b):
        zero = jnp.zeros((h.shape[0], 1, h.shape[2]), h.dtype)
        h_m1 = jnp.concatenate([zero, h[:, :-1]], axis=1)
        h_p1 = jnp.concatenate([h[:, 1:], zero], axis=1)
        return (jnp.einsum("btc,cf->btf", h_m1, w[0])
                + jnp.einsum("btc,cf->btf", h, w[1])
                + jnp.einsum("btc,cf->btf", h_p1, w[2]) + b[0])

    def ln(h, g, b, eps=1e-5):
        mu = jnp.mean(h, -1, keepdims=True)
        var = jnp.mean((h - mu) ** 2, -1, keepdims=True)
        return (h - mu) * jax.lax.rsqrt(var + eps) * g[0] + b[0]

    h = jnp.maximum(ln(conv(x, p["conv1_w"], p["conv1_b"]), p["ln1_g"], p["ln1_b"]), 0.0)
    h = jnp.maximum(ln(conv(h, p["conv2_w"], p["conv2_b"]), p["ln2_g"], p["ln2_b"]), 0.0)
    out = jnp.maximum(jnp.sum(h * p["lin_w"][0], -1) + p["lin_b"][0, 0], 0.0)
    return out[None, :, :]


# ------------------------------ main -----------------------------------------

if __name__ == "__main__":
    # model_config (small, synthetic):
    #   encoder_dim = 32, duration_predictor_filter_size = 32,
    #   duration_predictor_kernel_size = 3, variance_dropout = 0.1 (identity, eval)
    E, F, K = 32, 32, 3

    key = jax.random.PRNGKey(0)
    ks = jax.random.split(key, 9)

    # Conv weights stored as (K, Cin, Cout) == transpose of torch's (Cout, Cin, K).
    params = {
        "conv1_w": 0.1 * jax.random.normal(ks[0], (K, E, F), jnp.float32),
        "conv1_b": 0.1 * jax.random.normal(ks[1], (1, F), jnp.float32),
        "ln1_g": jnp.ones((1, F), jnp.float32),
        "ln1_b": jnp.zeros((1, F), jnp.float32),
        "conv2_w": 0.1 * jax.random.normal(ks[2], (K, F, F), jnp.float32),
        "conv2_b": 0.1 * jax.random.normal(ks[3], (1, F), jnp.float32),
        "ln2_g": jnp.ones((1, F), jnp.float32),
        "ln2_b": jnp.zeros((1, F), jnp.float32),
        "lin_w": 0.1 * jax.random.normal(ks[4], (1, F), jnp.float32),
        "lin_b": 0.1 * jax.random.normal(ks[5], (1, 1), jnp.float32),
    }

    # ---- small demo shape (falls back to a single full-array grid step) ----
    B, T = 2, 8
    encoder_output = jax.random.normal(ks[6], (B, T, E), jnp.float32)
    ref = jax.block_until_ready(_reference_forward(encoder_output, params))
    out = jax.block_until_ready(
        energy_predictor_forward(encoder_output, params,
                                 compute_dtype=jnp.float32))
    assert out.shape == (1, B, T), out.shape
    np.testing.assert_allclose(np.asarray(out), np.asarray(ref),
                               rtol=2e-4, atol=2e-4)

    # ---- 128-aligned shape exercising the multi-step pipelined path --------
    # B=8, T=128 -> auto batch_tile=4, n=512 rows/step, grid=(2,) ("parallel").
    B2, T2 = 8, 128
    enc2 = jax.random.normal(ks[7], (B2, T2, E), jnp.float32)
    ref2 = jax.block_until_ready(_reference_forward(enc2, params))
    out2 = jax.block_until_ready(
        energy_predictor_forward(enc2, params, compute_dtype=jnp.float32))
    assert out2.shape == (1, B2, T2), out2.shape
    np.testing.assert_allclose(np.asarray(out2), np.asarray(ref2),
                               rtol=2e-4, atol=2e-4)

    # bf16 MXU path (v6e/v7x-friendly): loose check.
    out_bf16 = jax.block_until_ready(
        energy_predictor_forward(enc2, params, compute_dtype=jnp.bfloat16))
    assert out_bf16.shape == (1, B2, T2), out_bf16.shape
    np.testing.assert_allclose(np.asarray(out_bf16), np.asarray(ref2),
                               rtol=1e-1, atol=1e-1)

    print("KERNEL_OK")
</pallas_src>

<mosaic_0001>
module attributes {stable_mosaic.version = 11 : i64} {
  func.func @_energy_predictor_kernel(%arg0: i32, %arg1: memref<16x32xf32, #tpu.memory_space<vmem>>, %arg2: memref<96x32xf32, #tpu.memory_space<vmem>>, %arg3: memref<96x32xf32, #tpu.memory_space<vmem>>, %arg4: memref<8x32xf32, #tpu.memory_space<vmem>>, %arg5: memref<1x1xf32, #tpu.memory_space<smem>>, %arg6: memref<1x16xf32, #tpu.memory_space<vmem>>) attributes {dimension_semantics = [#tpu.dimension_semantics<parallel>], iteration_bounds = array<i64: 1>, scalar_prefetch = 0 : i64, scratch_operands = 0 : i64, tpu.core_type = #tpu.core_type<tc>, window_params = [{transform_indices = @transform_0, window_bounds = array<i64: 16, 32>}, {pipeline_mode = #tpu.pipeline_mode<synchronous>, transform_indices = @transform_1, window_bounds = array<i64: 96, 32>}, {pipeline_mode = #tpu.pipeline_mode<synchronous>, transform_indices = @transform_2, window_bounds = array<i64: 96, 32>}, {pipeline_mode = #tpu.pipeline_mode<synchronous>, transform_indices = @transform_3, window_bounds = array<i64: 8, 32>}, {transform_indices = @transform_4, window_bounds = array<i64: 1, 1>}, {transform_indices = @transform_5, window_bounds = array<i64: 1, 16>}]} {
    %c0 = arith.constant 0 : index
    %c0_0 = arith.constant 0 : index
    %0 = vector.load %arg1[%c0, %c0_0] : memref<16x32xf32, #tpu.memory_space<vmem>>, vector<16x32xf32>
    %c0_1 = arith.constant 0 : index
    %c0_2 = arith.constant 0 : index
    %1 = vector.load %arg4[%c0_1, %c0_2] : memref<8x32xf32, #tpu.memory_space<vmem>>, vector<8x32xf32>
    %2 = tpu.iota {dimensions = array<i32: 0>} : vector<16x1xi32>
    %c8_i32 = arith.constant 8 : i32
    %c0_i32 = arith.constant 0 : i32
    %3 = arith.cmpi eq, %c8_i32, %c0_i32 : i32
    %c1_i32 = arith.constant 1 : i32
    %4 = arith.select %3, %c1_i32, %c8_i32 : i32
    %5 = vector.broadcast %4 : i32 to vector<16x1xi32>
    %6 = arith.remsi %2, %5 : vector<16x1xi32>
    %c0_i32_3 = arith.constant 0 : i32
    %7 = vector.broadcast %c0_i32_3 : i32 to vector<16x1xi32>
    %8 = arith.cmpi ne, %6, %7 : vector<16x1xi32>
    %c0_i32_4 = arith.constant 0 : i32
    %9 = vector.broadcast %c0_i32_4 : i32 to vector<16x1xi32>
    %10 = arith.cmpi slt, %6, %9 : vector<16x1xi32>
    %c0_i32_5 = arith.constant 0 : i32
    %11 = arith.cmpi slt, %4, %c0_i32_5 : i32
    %12 = vector.broadcast %11 : i1 to vector<16x1xi1>
    %13 = vector.broadcast %12 : vector<16x1xi1> to vector<16x1xi1>
    %14 = arith.xori %10, %13 : vector<16x1xi1>
    %15 = arith.andi %14, %8 : vector<16x1xi1>
    %16 = vector.broadcast %4 : i32 to vector<16x1xi32>
    %17 = arith.addi %6, %16 : vector<16x1xi32>
    %18 = arith.select %15, %17, %6 : vector<16x1xi1>, vector<16x1xi32>
    %c0_i32_6 = arith.constant 0 : i32
    %19 = vector.broadcast %c0_i32_6 : i32 to vector<16x1xi32>
    %20 = arith.cmpi eq, %18, %19 : vector<16x1xi32>
    %c7_i32 = arith.constant 7 : i32
    %21 = vector.broadcast %c7_i32 : i32 to vector<16x1xi32>
    %22 = arith.cmpi eq, %18, %21 : vector<16x1xi32>
    %23 = vector.extract_strided_slice %1 {offsets = [0, 0], sizes = [1, 32], strides = [1, 1]} : vector<8x32xf32> to vector<1x32xf32>
    %24 = vector.shape_cast %23 : vector<1x32xf32> to vector<32xf32>
    %25 = vector.extract_strided_slice %1 {offsets = [1, 0], sizes = [1, 32], strides = [1, 1]} : vector<8x32xf32> to vector<1x32xf32>
    %26 = vector.shape_cast %25 : vector<1x32xf32> to vector<32xf32>
    %27 = vector.extract_strided_slice %1 {offsets = [2, 0], sizes = [1, 32], strides = [1, 1]} : vector<8x32xf32> to vector<1x32xf32>
    %28 = vector.shape_cast %27 : vector<1x32xf32> to vector<32xf32>
    %c1_i32_7 = arith.constant 1 : i32
    %29 = tpu.dynamic_rotate %0 by %c1_i32_7 dim 0 : vector<16x32xf32>, i32 -> vector<16x32xf32>
    %cst = arith.constant 0.000000e+00 : f32
    %30 = vector.shape_cast %20 : vector<16x1xi1> to vector<16x1xi1>
    %31 = vector.broadcast %30 : vector<16x1xi1> to vector<16x32xi1>
    %32 = vector.broadcast %cst : f32 to vector<16x32xf32>
    %33 = arith.select %31, %32, %29 : vector<16x32xi1>, vector<16x32xf32>
    %c15_i32 = arith.constant 15 : i32
    %34 = tpu.dynamic_rotate %0 by %c15_i32 dim 0 : vector<16x32xf32>, i32 -> vector<16x32xf32>
    %cst_8 = arith.constant 0.000000e+00 : f32
    %35 = vector.shape_cast %22 : vector<16x1xi1> to vector<16x1xi1>
    %36 = vector.broadcast %35 : vector<16x1xi1> to vector<16x32xi1>
    %37 = vector.broadcast %cst_8 : f32 to vector<16x32xf32>
    %38 = arith.select %36, %37, %34 : vector<16x32xi1>, vector<16x32xf32>
    %39 = tpu.concatenate %33, %0, %38 in 1 : vector<16x32xf32>, vector<16x32xf32>, vector<16x32xf32> -> vector<16x96xf32>
    %c0_9 = arith.constant 0 : index
    %c0_10 = arith.constant 0 : index
    %40 = vector.load %arg2[%c0_9, %c0_10] : memref<96x32xf32, #tpu.memory_space<vmem>>, vector<96x32xf32>
    %cst_11 = arith.constant dense<0.000000e+00> : vector<16x32xf32>
    %41 = tpu.matmul %39, %40, %cst_11 {dimension_numbers = #tpu.dot_dimension_numbers<[1], [0], [0], [1], [0, 0, 1, 1], [], []>} : vector<16x96xf32>, vector<96x32xf32>, vector<16x32xf32> -> vector<16x32xf32>
    %42 = vector.shape_cast %24 : vector<32xf32> to vector<1x32xf32>
    %43 = vector.broadcast %42 : vector<1x32xf32> to vector<16x32xf32>
    %44 = arith.addf %41, %43 : vector<16x32xf32>
    %cst_12 = arith.constant dense<0.000000e+00> : vector<16xf32>
    %45 = vector.multi_reduction <add>, %44, %cst_12 [1] : vector<16x32xf32> to vector<16xf32>
    %46 = vector.shape_cast %45 : vector<16xf32> to vector<16x1xf32>
    %cst_13 = arith.constant 3.200000e+01 : f32
    %47 = vector.broadcast %cst_13 : f32 to vector<16x1xf32>
    %48 = arith.divf %46, %47 : vector<16x1xf32>
    %49 = arith.mulf %44, %44 : vector<16x32xf32>
    %cst_14 = arith.constant dense<0.000000e+00> : vector<16xf32>
    %50 = vector.multi_reduction <add>, %49, %cst_14 [1] : vector<16x32xf32> to vector<16xf32>
    %51 = vector.shape_cast %50 : vector<16xf32> to vector<16x1xf32>
    %cst_15 = arith.constant 3.200000e+01 : f32
    %52 = vector.broadcast %cst_15 : f32 to vector<16x1xf32>
    %53 = arith.divf %51, %52 : vector<16x1xf32>
    %54 = arith.mulf %48, %48 : vector<16x1xf32>
    %55 = arith.subf %53, %54 : vector<16x1xf32>
    %cst_16 = arith.constant 0.000000e+00 : f32
    %56 = vector.broadcast %cst_16 : f32 to vector<16x1xf32>
    %57 = arith.maximumf %55, %56 : vector<16x1xf32>
    %58 = vector.broadcast %48 : vector<16x1xf32> to vector<16x32xf32>
    %59 = arith.subf %44, %58 : vector<16x32xf32>
    %cst_17 = arith.constant 9.99999974E-6 : f32
    %60 = vector.broadcast %cst_17 : f32 to vector<16x1xf32>
    %61 = arith.addf %57, %60 : vector<16x1xf32>
    %62 = math.rsqrt %61 : vector<16x1xf32>
    %63 = vector.broadcast %62 : vector<16x1xf32> to vector<16x32xf32>
    %64 = arith.mulf %59, %63 : vector<16x32xf32>
    %65 = vector.shape_cast %26 : vector<32xf32> to vector<1x32xf32>
    %66 = vector.broadcast %65 : vector<1x32xf32> to vector<16x32xf32>
    %67 = arith.mulf %64, %66 : vector<16x32xf32>
    %68 = vector.shape_cast %28 : vector<32xf32> to vector<1x32xf32>
    %69 = vector.broadcast %68 : vector<1x32xf32> to vector<16x32xf32>
    %70 = arith.addf %67, %69 : vector<16x32xf32>
    %cst_18 = arith.constant 0.000000e+00 : f32
    %71 = vector.broadcast %cst_18 : f32 to vector<16x32xf32>
    %72 = arith.maximumf %70, %71 : vector<16x32xf32>
    %73 = vector.extract_strided_slice %1 {offsets = [3, 0], sizes = [1, 32], strides = [1, 1]} : vector<8x32xf32> to vector<1x32xf32>
    %74 = vector.shape_cast %73 : vector<1x32xf32> to vector<32xf32>
    %75 = vector.extract_strided_slice %1 {offsets = [4, 0], sizes = [1, 32], strides = [1, 1]} : vector<8x32xf32> to vector<1x32xf32>
    %76 = vector.shape_cast %75 : vector<1x32xf32> to vector<32xf32>
    %77 = vector.extract_strided_slice %1 {offsets = [5, 0], sizes = [1, 32], strides = [1, 1]} : vector<8x32xf32> to vector<1x32xf32>
    %78 = vector.shape_cast %77 : vector<1x32xf32> to vector<32xf32>
    %c1_i32_19 = arith.constant 1 : i32
    %79 = tpu.dynamic_rotate %72 by %c1_i32_19 dim 0 : vector<16x32xf32>, i32 -> vector<16x32xf32>
    %cst_20 = arith.constant 0.000000e+00 : f32
    %80 = vector.shape_cast %20 : vector<16x1xi1> to vector<16x1xi1>
    %81 = vector.broadcast %80 : vector<16x1xi1> to vector<16x32xi1>
    %82 = vector.broadcast %cst_20 : f32 to vector<16x32xf32>
    %83 = arith.select %81, %82, %79 : vector<16x32xi1>, vector<16x32xf32>
    %c15_i32_21 = arith.constant 15 : i32
    %84 = tpu.dynamic_rotate %72 by %c15_i32_21 dim 0 : vector<16x32xf32>, i32 -> vector<16x32xf32>
    %cst_22 = arith.constant 0.000000e+00 : f32
    %85 = vector.shape_cast %22 : vector<16x1xi1> to vector<16x1xi1>
    %86 = vector.broadcast %85 : vector<16x1xi1> to vector<16x32xi1>
    %87 = vector.broadcast %cst_22 : f32 to vector<16x32xf32>
    %88 = arith.select %86, %87, %84 : vector<16x32xi1>, vector<16x32xf32>
    %89 = tpu.concatenate %83, %72, %88 in 1 : vector<16x32xf32>, vector<16x32xf32>, vector<16x32xf32> -> vector<16x96xf32>
    %c0_23 = arith.constant 0 : index
    %c0_24 = arith.constant 0 : index
    %90 = vector.load %arg3[%c0_23, %c0_24] : memref<96x32xf32, #tpu.memory_space<vmem>>, vector<96x32xf32>
    %cst_25 = arith.constant dense<0.000000e+00> : vector<16x32xf32>
    %91 = tpu.matmul %89, %90, %cst_25 {dimension_numbers = #tpu.dot_dimension_numbers<[1], [0], [0], [1], [0, 0, 1, 1], [], []>} : vector<16x96xf32>, vector<96x32xf32>, vector<16x32xf32> -> vector<16x32xf32>
    %92 = vector.shape_cast %74 : vector<32xf32> to vector<1x32xf32>
    %93 = vector.broadcast %92 : vector<1x32xf32> to vector<16x32xf32>
    %94 = arith.addf %91, %93 : vector<16x32xf32>
    %cst_26 = arith.constant dense<0.000000e+00> : vector<16xf32>
    %95 = vector.multi_reduction <add>, %94, %cst_26 [1] : vector<16x32xf32> to vector<16xf32>
    %96 = vector.shape_cast %95 : vector<16xf32> to vector<16x1xf32>
    %cst_27 = arith.constant 3.200000e+01 : f32
    %97 = vector.broadcast %cst_27 : f32 to vector<16x1xf32>
    %98 = arith.divf %96, %97 : vector<16x1xf32>
    %99 = arith.mulf %94, %94 : vector<16x32xf32>
    %cst_28 = arith.constant dense<0.000000e+00> : vector<16xf32>
    %100 = vector.multi_reduction <add>, %99, %cst_28 [1] : vector<16x32xf32> to vector<16xf32>
    %101 = vector.shape_cast %100 : vector<16xf32> to vector<16x1xf32>
    %cst_29 = arith.constant 3.200000e+01 : f32
    %102 = vector.broadcast %cst_29 : f32 to vector<16x1xf32>
    %103 = arith.divf %101, %102 : vector<16x1xf32>
    %104 = arith.mulf %98, %98 : vector<16x1xf32>
    %105 = arith.subf %103, %104 : vector<16x1xf32>
    %cst_30 = arith.constant 0.000000e+00 : f32
    %106 = vector.broadcast %cst_30 : f32 to vector<16x1xf32>
    %107 = arith.maximumf %105, %106 : vector<16x1xf32>
    %108 = vector.broadcast %98 : vector<16x1xf32> to vector<16x32xf32>
    %109 = arith.subf %94, %108 : vector<16x32xf32>
    %cst_31 = arith.constant 9.99999974E-6 : f32
    %110 = vector.broadcast %cst_31 : f32 to vector<16x1xf32>
    %111 = arith.addf %107, %110 : vector<16x1xf32>
    %112 = math.rsqrt %111 : vector<16x1xf32>
    %113 = vector.broadcast %112 : vector<16x1xf32> to vector<16x32xf32>
    %114 = arith.mulf %109, %113 : vector<16x32xf32>
    %115 = vector.shape_cast %76 : vector<32xf32> to vector<1x32xf32>
    %116 = vector.broadcast %115 : vector<1x32xf32> to vector<16x32xf32>
    %117 = arith.mulf %114, %116 : vector<16x32xf32>
    %118 = vector.shape_cast %78 : vector<32xf32> to vector<1x32xf32>
    %119 = vector.broadcast %118 : vector<1x32xf32> to vector<16x32xf32>
    %120 = arith.addf %117, %119 : vector<16x32xf32>
    %cst_32 = arith.constant 0.000000e+00 : f32
    %121 = vector.broadcast %cst_32 : f32 to vector<16x32xf32>
    %122 = arith.maximumf %120, %121 : vector<16x32xf32>
    %123 = vector.extract_strided_slice %1 {offsets = [6, 0], sizes = [1, 32], strides = [1, 1]} : vector<8x32xf32> to vector<1x32xf32>
    %124 = vector.shape_cast %123 : vector<1x32xf32> to vector<32xf32>
    %125 = vector.shape_cast %124 : vector<32xf32> to vector<1x32xf32>
    %126 = vector.broadcast %125 : vector<1x32xf32> to vector<16x32xf32>
    %127 = arith.mulf %122, %126 : vector<16x32xf32>
    %cst_33 = arith.constant dense<0.000000e+00> : vector<16xf32>
    %128 = vector.multi_reduction <add>, %127, %cst_33 [1] : vector<16x32xf32> to vector<16xf32>
    %c0_34 = arith.constant 0 : index
    %c0_35 = arith.constant 0 : index
    %129 = memref.load %arg5[%c0_34, %c0_35] : memref<1x1xf32, #tpu.memory_space<smem>>
    %130 = vector.broadcast %129 : f32 to vector<16xf32>
    %131 = arith.addf %128, %130 : vector<16xf32>
    %cst_36 = arith.constant 0.000000e+00 : f32
    %132 = vector.broadcast %cst_36 : f32 to vector<16xf32>
    %133 = arith.maximumf %131, %132 : vector<16xf32>
    %c0_37 = arith.constant 0 : index
    %c0_38 = arith.constant 0 : index
    %134 = vector.load %arg6[%c0_37, %c0_38] : memref<1x16xf32, #tpu.memory_space<vmem>>, vector<1x16xf32>
    %135 = vector.shape_cast %134 : vector<1x16xf32> to vector<16xf32>
    %136 = vector.shape_cast %133 : vector<16xf32> to vector<1x16xf32>
    tpu.vector_store %arg6[%c0_37, %c0_38], %136 {strides = array<i32>} : memref<1x16xf32, #tpu.memory_space<vmem>>, vector<1x16xf32>,
    return
  }
  func.func @transform_0(%arg0: i32) -> (i32, i32) {
    %c0_i32 = arith.constant 0 : i32
    %c0_i32_0 = arith.constant 0 : i32
    return %arg0, %c0_i32 : i32, i32
  }
  func.func @transform_1(%arg0: i32) -> (i32, i32) {
    %c0_i32 = arith.constant 0 : i32
    %c0_i32_0 = arith.constant 0 : i32
    %c0_i32_1 = arith.constant 0 : i32
    return %c0_i32, %c0_i32_0 : i32, i32
  }
  func.func @transform_2(%arg0: i32) -> (i32, i32) {
    %c0_i32 = arith.constant 0 : i32
    %c0_i32_0 = arith.constant 0 : i32
    %c0_i32_1 = arith.constant 0 : i32
    return %c0_i32, %c0_i32_0 : i32, i32
  }
  func.func @transform_3(%arg0: i32) -> (i32, i32) {
    %c0_i32 = arith.constant 0 : i32
    %c0_i32_0 = arith.constant 0 : i32
    %c0_i32_1 = arith.constant 0 : i32
    return %c0_i32, %c0_i32_0 : i32, i32
  }
  func.func @transform_4(%arg0: i32) -> (i32, i32) {
    %c0_i32 = arith.constant 0 : i32
    %c0_i32_0 = arith.constant 0 : i32
    %c0_i32_1 = arith.constant 0 : i32
    return %c0_i32, %c0_i32_0 : i32, i32
  }
  func.func @transform_5(%arg0: i32) -> (i32, i32) {
    %c0_i32 = arith.constant 0 : i32
    %c0_i32_0 = arith.constant 0 : i32
    return %c0_i32, %arg0 : i32, i32
  }
}

</mosaic_0001>

<llo_original>
// kernel: tpu_custom_call.1
$region0: #{tpu_custom_call.1}
  #allocation0 [shape = 'u32[]', space=smem, size = 0x4, offset = 0x4, fixed_abs, tag = 'smem constant byte address 0x4 - core index']
  #allocation1 [shape = 'u32[72,128]{1,0:T(1,128)}', space=vmem, size = 0x9000, scoped, tag = 'internal scratch']
  #allocation2 [shape = 'f32[1,1]{1,0:T(1,128)S(6)}', space=smem, size = 0x200, scoped, tag = 'scoped memory for tpu_custom_call.1']
  %s0 = inlined_call_operand.vmem [shape: f32[16,32], index: 0, kind: input, shape index: {}]
  %s1 = inlined_call_operand.vmem [shape: f32[96,32], index: 1, kind: input, shape index: {}]
  %s2 = inlined_call_operand.vmem [shape: f32[96,32], index: 2, kind: input, shape index: {}]
  %s3 = inlined_call_operand.vmem [shape: f32[8,32], index: 3, kind: input, shape index: {}]
  %s4 = inlined_call_operand.<no memory space> [shape: f32[1,1], index: 4, kind: input, shape index: {}]
  %s5 = inlined_call_operand.hbm [shape: f32[1,16], index: 5, kind: output, shape index: {}]
  %s6 = sld [smem:[#allocation0]]
  $region30: #{tpu_custom_call.1} parent=0
    _
  %s8 = ssub.s32 1, %s6
  %s9 = scalar_select 0, %s8, %s6
  %10 = sst [smem:[#allocation2]] %s4
  $region1: #{tpu_custom_call.1} parent=0
    #allocation3 [shape = 'u8[512]{0}', space=vmem, size = 0x400, scoped, tag = 'output window, operand 0, single buffered']
    #allocation4 [shape = 's32[1]{0}', space=sflag, size = 0x4, scoped, tag = 'scoped memory for tpu_custom_call.1']
    %11 = vsyncpa [#allocation4], 0
    // Predicated region
    $region2: #{tpu_custom_call.1} parent=1 // pred_check
      _
    $region3: #{tpu_custom_call.1} parent=1 // pred_check_branch
      %13 = sbr.rel (0) target = $region5
    $region4: #{tpu_custom_call.1} parent=1 // pred_region
      _
    $region5: #{tpu_custom_call.1} parent=1 // pred_fallthru
      _
    // Predicated region
    $region6: #{tpu_custom_call.1} parent=1 // pred_check
      _
    $region7: #{tpu_custom_call.1} parent=1 // pred_check_branch
      %15 = sbr.rel (0) target = $region9
    $region8: #{tpu_custom_call.1} parent=1 // pred_region
      _
    $region9: #{tpu_custom_call.1} parent=1 // pred_fallthru
      _
    // Predicated region
    $region10: #{tpu_custom_call.1} parent=1 // pred_check
      _
    $region11: #{tpu_custom_call.1} parent=1 // pred_check_branch
      %17 = sbr.rel (0) target = $region13
    $region12: #{tpu_custom_call.1} parent=1 // pred_region
      _
    $region13: #{tpu_custom_call.1} parent=1 // pred_fallthru
      _
    // Predicated region
    $region14: #{tpu_custom_call.1} parent=1 // pred_check
      _
    $region15: #{tpu_custom_call.1} parent=1 // pred_check_branch
      %19 = sbr.rel (0) target = $region17
    $region16: #{tpu_custom_call.1} parent=1 // pred_region
      _
    $region17: #{tpu_custom_call.1} parent=1 // pred_fallthru
      _
    // Predicated region
    $region18: #{tpu_custom_call.1} parent=1 // pred_check
      _
    $region19: #{tpu_custom_call.1} parent=1 // pred_check_branch
      %21 = sbr.rel (0) target = $region21
    $region20: #{tpu_custom_call.1} parent=1 // pred_region
      _
    $region21: #{tpu_custom_call.1} parent=1 // pred_fallthru
      _
    %v22 = vld [vmem:[%s0] sm:$0xff]
    %v23 = vld [vmem:[%s0 + $0x8] sm:$0xff]
    %v24 = vld [vmem:[%s3] sm:$0xff]
    %v25 = vlaneseq
    %v26 = vshrl.u32 %v25, 7
    %v27 = vadd.s32 %v26, 8
    %vm28 = vcmp.lt.s32.totalorder %v26, 0
    %v29 = vsub.s32 0, %v26
    %v30 = vsel %vm28, %v29, %v26
    %v31 = vshrl.u32 %v30, 3
    %v32 = vand.u32 %v30, 7
    %v33 = vsub.s32 0, %v32
    %v34 = vsel %vm28, %v33, %v32
    %vm35 = vcmp.lt.s32.totalorder %v27, 0
    %v36 = vsub.s32 0, %v27
    %v37 = vsel %vm35, %v36, %v27
    %v38 = vshrl.u32 %v37, 3
    %v39 = vand.u32 %v37, 7
    %v40 = vsub.s32 0, %v39
    %v41 = vsel %vm35, %v40, %v39
    %vm42 = vcmp.ne.s32.totalorder %v34, 0
    %vm43 = vcmp.ne.s32.totalorder %v41, 0
    %vm44 = vcmp.lt.s32.totalorder %v34, 0
    %vm45 = vcmp.lt.s32.totalorder %v41, 0
    %vm46 = vmand %vm44, %vm42
    %vm47 = vmand %vm45, %vm43
    %v48 = vadd.s32 %v34, 8
    %v49 = vadd.s32 %v41, 8
    %v50 = vsel %vm46, %v48, %v34
    %v51 = vsel %vm47, %v49, %v41
    %vm52 = vcmp.eq.s32.totalorder %v50, 0
    %vm53 = vcmp.eq.s32.totalorder %v51, 0
    %vm54 = vcmp.eq.s32.totalorder %v50, 7
    %vm55 = vcmp.eq.s32.totalorder %v51, 7
    %v56 = vrot.slane %v22, 7
    %v57 = vrot.slane %v23, 7
    %vm58 = vcmp.lt.s32.totalorder %v26, 1
    %v59 = vsel %vm58, %v56, %v57
    %v60 = vsel %vm58, %v57, %v56
    %v61 = vsel %vm52, 1, 0
    %v62 = vsel %vm53, 1, 0
    %vm63 = vcmp.eq.s32.totalorder %v61, 1
    %vm64 = vcmp.eq.s32.totalorder %v62, 1
    %v65 = vsel %vm63, 0.0, %v60
    %v66 = vsel %vm64, 0.0, %v59
    %v67 = vrot.slane %v22, 1
    %v68 = vrot.slane %v23, 1
    %vm69 = vcmp.lt.s32.totalorder %v26, 7
    %v70 = vsel %vm69, %v67, %v68
    %v71 = vsel %vm69, %v68, %v67
    %v72 = vsel %vm54, 1, 0
    %v73 = vsel %vm55, 1, 0
    %vm74 = vcmp.eq.s32.totalorder %v72, 1
    %vm75 = vcmp.eq.s32.totalorder %v73, 1
    %v76 = vsel %vm74, 0.0, %v70
    %v77 = vsel %vm75, 0.0, %v71
    %80 = vrot.lane.b32.xlu0 %v22, 32
    %v81 = vpop.permute.xlu0 %80
    %82 = vrot.lane.b32.xlu0 %v23, 32
    %v83 = vpop.permute.xlu0 %82
    %88 = vrot.lane.b32.xlu0 %v76, 64
    %v89 = vpop.permute.xlu0 %88
    %90 = vrot.lane.b32.xlu0 %v77, 64
    %v91 = vpop.permute.xlu0 %90
    %vm94 = vcmask 261120
    %v95 = vsel %vm94, %v65, %v81
    %v96 = vsel %vm94, %v66, %v83
    %vm97 = vcmask 523264
    %v98 = vsel %vm97, %v95, %v89
    %v99 = vsel %vm97, %v96, %v91
    %v100 = vld [vmem:[%s1] sm:$0xff]
    %v101 = vld [vmem:[%s1 + $0x8] sm:$0xff]
    %v102 = vld [vmem:[%s1 + $0x10] sm:$0xff]
    %v103 = vld [vmem:[%s1 + $0x18] sm:$0xff]
    %v104 = vld [vmem:[%s1 + $0x20] sm:$0xff]
    %v105 = vld [vmem:[%s1 + $0x28] sm:$0xff]
    %v106 = vld [vmem:[%s1 + $0x30] sm:$0xff]
    %v107 = vld [vmem:[%s1 + $0x38] sm:$0xff]
    %v108 = vld [vmem:[%s1 + $0x40] sm:$0xff]
    %v109 = vld [vmem:[%s1 + $0x48] sm:$0xff]
    %v110 = vld [vmem:[%s1 + $0x50] sm:$0xff]
    %v111 = vld [vmem:[%s1 + $0x58] sm:$0xff]
    %v112 = vperm.slane %v24, 0
    %vm113 = vcmask 785408
    %v115 = vsel %vm113, %v98, 0
    %v118 = vsel %vm113, %v99, 0
    %120 = vmatpush.msra.mxu0 0.0
    %121 = vmatpush.msra.mxu0 0.0
    %122 = vmatpush.msra.mxu0 0.0
    %123 = vmatpush.msra.mxu0 0.0
    %124 = vmatpush.msra.mxu0 %v111
    %125 = vmatpush.msra.mxu0 %v110
    %126 = vmatpush.msra.mxu0 %v109
    %127 = vmatpush.msra.mxu0 %v108
    %128 = vmatpush.msra.mxu0 %v107
    %129 = vmatpush.msra.mxu0 %v106
    %130 = vmatpush.msra.mxu0 %v105
    %131 = vmatpush.msra.mxu0 %v104
    %132 = vmatpush.msra.mxu0 %v103
    %133 = vmatpush.msra.mxu0 %v102
    %134 = vmatpush.msra.mxu0 %v101
    %135 = vmatpush.msra.mxu0 %v100
    %136 = vmatmul.f32.gmra.mxu0 %v115
    %v137 = vpop.f32.mrf.mxu0
    %v138 = vadd.f32 %v112, %v137
    %139 = vmatmul.f32.gmra.mxu0 %v118
    %v140 = vpop.f32.mrf.mxu0
    %v141 = vadd.f32 %v112, %v140
    %142 = vdwg.mxu0
    %v143 = vsel %vm94, %v138, 0.0
    %144 = vadd.xlane.f32.xlu0 %v143
    %v145 = vpop.xlane.xlu0 %144
    %v146 = vsel %vm94, %v141, 0.0
    %147 = vadd.xlane.f32.xlu0 %v146
    %v148 = vpop.xlane.xlu0 %147
    %v149 = vrcp.pop 32.0
    %v150 = vmul.f32 32.0, %v149
    %v151 = vsub.f32 1.0, %v150
    %v152 = vmul.f32 %v149, %v151
    %v153 = vadd.f32 %v149, %v152
    %vm154 = vweird.f32 %v149
    %v155 = vsel %vm154, %v149, %v153
    %v156 = vmul.f32 %v145, %v155
    %v157 = vmul.f32 %v148, %v155
    %v158 = vmul.f32 %v138, %v138
    %v159 = vmul.f32 %v141, %v141
    %v160 = vsel %vm94, %v158, 0.0
    %161 = vadd.xlane.f32.xlu0 %v160
    %v162 = vpop.xlane.xlu0 %161
    %v163 = vsel %vm94, %v159, 0.0
    %164 = vadd.xlane.f32.xlu0 %v163
    %v165 = vpop.xlane.xlu0 %164
    %v166 = vmul.f32 %v162, %v155
    %v167 = vmul.f32 %v165, %v155
    %v168 = vmul.f32 %v156, %v156
    %v169 = vmul.f32 %v157, %v157
    %v170 = vsub.f32 %v166, %v168
    %v171 = vsub.f32 %v167, %v169
    %v172 = vmax.f32 %v170, 0.0
    %v173 = vmax.f32 %v171, 0.0
    %v174 = vsub.f32 %v138, %v156
    %v175 = vsub.f32 %v141, %v157
    %v176 = vadd.f32 %v172, 1e-05
    %v177 = vadd.f32 %v173, 1e-05
    %v178 = vrsqrt.pop %v176
    %v179 = vmul.f32 %v178, %v176
    %v180 = vmul.f32 %v179, %v178
    %v181 = vmul.f32 0.5, %v180
    %v182 = vsub.f32 1.5, %v181
    %v183 = vmul.f32 %v178, %v182
    %vm184 = vweird.f32 %v176
    %vm185 = vweird.f32 %v178
    %vm186 = vmor %vm184, %vm185
    %v187 = vsel %vm186, %v178, %v183
    %v188 = vrsqrt.pop %v177
    %v189 = vmul.f32 %v188, %v177
    %v190 = vmul.f32 %v189, %v188
    %v191 = vmul.f32 0.5, %v190
    %v192 = vsub.f32 1.5, %v191
    %v193 = vmul.f32 %v188, %v192
    %vm194 = vweird.f32 %v177
    %vm195 = vweird.f32 %v188
    %vm196 = vmor %vm194, %vm195
    %v197 = vsel %vm196, %v188, %v193
    %v198 = vmul.f32 %v174, %v187
    %v199 = vmul.f32 %v175, %v197
    %v200 = vperm.slane %v24, 1
    %v201 = vmul.f32 %v198, %v200
    %v202 = vmul.f32 %v199, %v200
    %v203 = vperm.slane %v24, 2
    %v204 = vadd.f32 %v201, %v203
    %v205 = vadd.f32 %v202, %v203
    %v206 = vmax.f32 %v204, 0.0
    %v207 = vmax.f32 %v205, 0.0
    %v208 = vrot.slane %v206, 7
    %v209 = vrot.slane %v207, 7
    %v210 = vsel %vm58, %v208, %v209
    %v211 = vsel %vm58, %v209, %v208
    %v212 = vsel %vm63, 0.0, %v211
    %v213 = vsel %vm64, 0.0, %v210
    %v214 = vrot.slane %v206, 1
    %v215 = vrot.slane %v207, 1
    %v216 = vsel %vm69, %v214, %v215
    %v217 = vsel %vm69, %v215, %v214
    %v218 = vsel %vm74, 0.0, %v216
    %v219 = vsel %vm75, 0.0, %v217
    %222 = vrot.lane.b32.xlu0 %v206, 32
    %v223 = vpop.permute.xlu0 %222
    %224 = vrot.lane.b32.xlu0 %v207, 32
    %v225 = vpop.permute.xlu0 %224
    %230 = vrot.lane.b32.xlu0 %v218, 64
    %v231 = vpop.permute.xlu0 %230
    %232 = vrot.lane.b32.xlu0 %v219, 64
    %v233 = vpop.permute.xlu0 %232
    %v236 = vsel %vm94, %v212, %v223
    %v237 = vsel %vm94, %v213, %v225
    %v238 = vsel %vm97, %v236, %v231
    %v239 = vsel %vm97, %v237, %v233
    %v240 = vld [vmem:[%s2] sm:$0xff]
    %v241 = vld [vmem:[%s2 + $0x8] sm:$0xff]
    %v242 = vld [vmem:[%s2 + $0x10] sm:$0xff]
    %v243 = vld [vmem:[%s2 + $0x18] sm:$0xff]
    %v244 = vld [vmem:[%s2 + $0x20] sm:$0xff]
    %v245 = vld [vmem:[%s2 + $0x28] sm:$0xff]
    %v246 = vld [vmem:[%s2 + $0x30] sm:$0xff]
    %v247 = vld [vmem:[%s2 + $0x38] sm:$0xff]
    %v248 = vld [vmem:[%s2 + $0x40] sm:$0xff]
    %v249 = vld [vmem:[%s2 + $0x48] sm:$0xff]
    %v250 = vld [vmem:[%s2 + $0x50] sm:$0xff]
    %v251 = vld [vmem:[%s2 + $0x58] sm:$0xff]
    %v252 = vperm.slane %v24, 3
    %v254 = vsel %vm113, %v238, 0
    %v257 = vsel %vm113, %v239, 0
    %259 = vmatpush.msra.mxu0 0.0
    %260 = vmatpush.msra.mxu0 0.0
    %261 = vmatpush.msra.mxu0 0.0
    %262 = vmatpush.msra.mxu0 0.0
    %263 = vmatpush.msra.mxu0 %v251
    %264 = vmatpush.msra.mxu0 %v250
    %265 = vmatpush.msra.mxu0 %v249
    %266 = vmatpush.msra.mxu0 %v248
    %267 = vmatpush.msra.mxu0 %v247
    %268 = vmatpush.msra.mxu0 %v246
    %269 = vmatpush.msra.mxu0 %v245
    %270 = vmatpush.msra.mxu0 %v244
    %271 = vmatpush.msra.mxu0 %v243
    %272 = vmatpush.msra.mxu0 %v242
    %273 = vmatpush.msra.mxu0 %v241
    %274 = vmatpush.msra.mxu0 %v240
    %275 = vmatmul.f32.gmra.mxu0 %v254
    %v276 = vpop.f32.mrf.mxu0
    %v277 = vadd.f32 %v252, %v276
    %278 = vmatmul.f32.gmra.mxu0 %v257
    %v279 = vpop.f32.mrf.mxu0
    %v280 = vadd.f32 %v252, %v279
    %281 = vdwg.mxu0
    %v282 = vsel %vm94, %v277, 0.0
    %283 = vadd.xlane.f32.xlu0 %v282
    %v284 = vpop.xlane.xlu0 %283
    %v285 = vsel %vm94, %v280, 0.0
    %286 = vadd.xlane.f32.xlu0 %v285
    %v287 = vpop.xlane.xlu0 %286
    %v288 = vmul.f32 %v284, %v155
    %v289 = vmul.f32 %v287, %v155
    %v290 = vmul.f32 %v277, %v277
    %v291 = vmul.f32 %v280, %v280
    %v292 = vsel %vm94, %v290, 0.0
    %293 = vadd.xlane.f32.xlu0 %v292
    %v294 = vpop.xlane.xlu0 %293
    %v295 = vsel %vm94, %v291, 0.0
    %296 = vadd.xlane.f32.xlu0 %v295
    %v297 = vpop.xlane.xlu0 %296
    %v298 = vmul.f32 %v294, %v155
    %v299 = vmul.f32 %v297, %v155
    %v300 = vmul.f32 %v288, %v288
    %v301 = vmul.f32 %v289, %v289
    %v302 = vsub.f32 %v298, %v300
    %v303 = vsub.f32 %v299, %v301
    %v304 = vmax.f32 %v302, 0.0
    %v305 = vmax.f32 %v303, 0.0
    %v306 = vsub.f32 %v277, %v288
    %v307 = vsub.f32 %v280, %v289
    %v308 = vadd.f32 %v304, 1e-05
    %v309 = vadd.f32 %v305, 1e-05
    %v310 = vrsqrt.pop %v308
    %v311 = vmul.f32 %v310, %v308
    %v312 = vmul.f32 %v311, %v310
    %v313 = vmul.f32 0.5, %v312
    %v314 = vsub.f32 1.5, %v313
    %v315 = vmul.f32 %v310, %v314
    %vm316 = vweird.f32 %v308
    %vm317 = vweird.f32 %v310
    %vm318 = vmor %vm316, %vm317
    %v319 = vsel %vm318, %v310, %v315
    %v320 = vrsqrt.pop %v309
    %v321 = vmul.f32 %v320, %v309
    %v322 = vmul.f32 %v321, %v320
    %v323 = vmul.f32 0.5, %v322
    %v324 = vsub.f32 1.5, %v323
    %v325 = vmul.f32 %v320, %v324
    %vm326 = vweird.f32 %v309
    %vm327 = vweird.f32 %v320
    %vm328 = vmor %vm326, %vm327
    %v329 = vsel %vm328, %v320, %v325
    %v330 = vmul.f32 %v306, %v319
    %v331 = vmul.f32 %v307, %v329
    %v332 = vperm.slane %v24, 4
    %v333 = vmul.f32 %v330, %v332
    %v334 = vmul.f32 %v331, %v332
    %v335 = vperm.slane %v24, 5
    %v336 = vadd.f32 %v333, %v335
    %v337 = vadd.f32 %v334, %v335
    %v338 = vmax.f32 %v336, 0.0
    %v339 = vmax.f32 %v337, 0.0
    %v340 = vperm.slane %v24, 6
    %v341 = vmul.f32 %v338, %v340
    %v342 = vmul.f32 %v339, %v340
    %v343 = vsel %vm94, %v341, 0.0
    %344 = vadd.xlane.f32.xlu0 %v343
    %v345 = vpop.xlane.xlu0 %344
    %v346 = vsel %vm94, %v342, 0.0
    %347 = vadd.xlane.f32.xlu0 %v346
    %v348 = vpop.xlane.xlu0 %347
    %s349 = sld [smem:[#allocation2]]
    %v350 = vstv %s349
    %v351 = vadd.f32 %v345, %v350
    %v352 = vadd.f32 %v348, %v350
    %v353 = vmax.f32 %v351, 0.0
    %v354 = vmax.f32 %v352, 0.0
    %v357 = vlaneseq
    %v358 = vand.u32 %v357, 127
    %v359 = vperm.slane %v353, %v358
    %v360 = vadd.s32 %v358, 4294967288
    %v361 = vperm.slane %v354, %v360
    %vm362 = vcmask 130112
    %v363 = vsel %vm362, %v361, %v359
    %vm365 = vcmask 122880
    %366 = vst.msk [vmem:[#allocation3] sm:$0x1] %vm365, %v363
    // Predicated region
    $region22: #{tpu_custom_call.1} parent=1 // pred_check
      _
    $region23: #{tpu_custom_call.1} parent=1 // pred_check_branch
      %368 = sbr.rel (0) target = $region25
    $region24: #{tpu_custom_call.1} parent=1 // pred_region
      %370 = vsyncadd [#allocation4], 0
      %s372 = sshll.u32 [#allocation3], 4
      %s373 = int_to_ptr.vmem [resolvable:$true] %s372
      %s374 = sshll.u32 %s5, 4
      %s375 = int_to_ptr.hbm [resolvable:$true] %s374
      %377 = dma.vmem_to_hbm [thread:$0]  %s373, 16, %s375, [#allocation4]
    $region25: #{tpu_custom_call.1} parent=1 // pred_fallthru
      _
    // Predicated region
    $region26: #{tpu_custom_call.1} parent=1 // pred_check
      _
    $region27: #{tpu_custom_call.1} parent=1 // pred_check_branch
      %379 = sbr.rel (0) target = $region29
    $region28: #{tpu_custom_call.1} parent=1 // pred_region
      %381 = dma.done [#allocation4], 16
    $region29: #{tpu_custom_call.1} parent=1 // pred_fallthru
      _
    %382 = vsyncpa [#allocation4], 1

</llo_original>
